<compile_context>
chip_gen: v7x
topology: tpu7x:2x2x1
jax: 0.10.0
libtpu: 0.0.40
codegen_flags: <defaults>
</compile_context>

<pallas_src>
import functools

import jax
import jax.numpy as jnp
from jax.experimental import pallas as pl
from jax.experimental.pallas import tpu as pltpu


def _round_up(x, m):
    return ((x + m - 1) // m) * m


def _num_tensorcores_per_chip():
    # v4 / v5p (megacore) and v7x expose 2 TensorCores per chip; v5e/v6e are 1.
    try:
        kind = (jax.devices()[0].device_kind or "").lower()
    except Exception:
        return 1
    if any(tag in kind for tag in ("v7", "v5p", "v4")):
        return 2
    return 1


# ---------------------------------------------------------------------------
# Fused LayerNorm(patch_dim) + Linear(patch_dim -> dim) over patch tokens.
# The LN affine is pre-folded into the weight/bias, so the kernel only does
# normalize + matmul.  Tokens are (T, P); the grid tiles the token rows.
# ---------------------------------------------------------------------------
def _ln_linear_kernel(eps, inv_p, x_ref, w_ref, bias_ref, o_ref):
    # x_ref: (tm, P) bf16   w_ref: (P, D) bf16   bias_ref: (1, D) f32
    # o_ref: (tm, D) bf16
    x = x_ref[...].astype(jnp.float32)
    # One-pass LayerNorm statistics in f32.
    s = jnp.sum(x, axis=-1, keepdims=True)
    ss = jnp.sum(x * x, axis=-1, keepdims=True)
    mean = s * inv_p
    var = jnp.maximum(ss * inv_p - mean * mean, 0.0)
    xn = (x - mean) * jax.lax.rsqrt(var + eps)
    # Matmul operand dtype follows the folded weight dtype (bf16 MXU path);
    # accumulate in f32.
    y = jnp.dot(xn.astype(w_ref.dtype), w_ref[...],
                preferred_element_type=jnp.float32)
    y = y + bias_ref[...]
    o_ref[...] = y.astype(o_ref.dtype)


def ln_linear(tokens, gamma, beta, w, bias, *, eps=1e-5, tm=None,
              out_dtype=jnp.bfloat16):
    """(LayerNorm(tokens) * gamma + beta) @ w + bias.  tokens: (T, P)."""
    T, P = tokens.shape
    D = w.shape[1]

    # Fold the LayerNorm affine into the linear layer (exact algebra, in f32).
    # Folded weight goes to HBM/MXU in bf16; the (1, D) bias stays f32
    # (negligible bytes, added straight to the f32 accumulator).
    w32 = w.astype(jnp.float32)
    w_eff = (w32 * gamma.astype(jnp.float32)[:, None]).astype(jnp.bfloat16)
    bias_eff = (beta.astype(jnp.float32) @ w32
                + bias.astype(jnp.float32)).reshape(1, D)

    ncores = _num_tensorcores_per_chip()
    if tm is None:
        # One tile per TensorCore when T is small; cap at 1024 rows.  The
        # double-buffered (tm, P) + (tm, D) bf16 tiles plus the resident
        # (P, D) weight stay around/under 1 MiB — far below even v7x's
        # 64 MiB VMEM — so the cap is about amortizing the ~0.35 us per-step
        # overhead, not VMEM pressure.
        tm = min(1024, _round_up(pl.cdiv(T, ncores), 16))
    tm = max(16, _round_up(tm, 16))

    # Pad the token count so the grid length is a multiple of the TensorCore
    # count (even split across v7x's 2 TCs, single big step on 1-TC chips for
    # small T).  Zero rows are LN-safe (rsqrt(eps) is finite) and sliced off.
    Tp = _round_up(T, tm * ncores)
    if Tp != T:
        tokens = jnp.pad(tokens, ((0, Tp - T), (0, 0)))

    out = pl.pallas_call(
        functools.partial(_ln_linear_kernel, float(eps), 1.0 / float(P)),
        out_shape=jax.ShapeDtypeStruct((Tp, D), out_dtype),
        grid=(Tp // tm,),
        in_specs=[
            pl.BlockSpec((tm, P), lambda i: (i, 0)),   # token row tile
            pl.BlockSpec((P, D), lambda i: (0, 0)),    # folded weight (resident)
            pl.BlockSpec((1, D), lambda i: (0, 0)),    # folded bias
        ],
        out_specs=pl.BlockSpec((tm, D), lambda i: (i, 0)),
        compiler_params=pltpu.CompilerParams(
            dimension_semantics=("parallel",),
            vmem_limit_bytes=32 * 1024 * 1024),
    )(tokens, w_eff, bias_eff)

    if Tp != T:
        out = out[:T]
    return out


# ---------------------------------------------------------------------------
# Full module forward.
# ---------------------------------------------------------------------------
@functools.partial(jax.jit, static_argnames=("patch_size",))
def _spt_forward(x, gamma, beta, w_lin, b_lin, patch_size):
    B, C, H, W = x.shape
    p = patch_size
    h, w = H // p, W // p
    s = p // 2

    # PatchShifting: center + 4 diagonal shifts of the zero-padded image,
    # summed (matches the reference module).  Left to XLA together with the
    # rearrange below; the bf16 cast before the transpose halves the tokens'
    # HBM round trip between the XLA rearrange and the Pallas kernel.
    # TODO(synk): the 6-D rearrange has no efficient in-kernel Mosaic
    # lowering, so it is not expressed as a Pallas kernel.
    xpad = jnp.pad(x, ((0, 0), (0, 0), (s, s), (s, s)))
    shifted = (x
               + xpad[:, :, :-2 * s, :-2 * s]    # left-up
               + xpad[:, :, :-2 * s, 2 * s:]     # right-up
               + xpad[:, :, 2 * s:, :-2 * s]     # left-bottom
               + xpad[:, :, 2 * s:, 2 * s:])     # right-bottom
    shifted = shifted.astype(jnp.bfloat16)

    # rearrange 'b c (h p1) (w p2) -> b (h w) (p1 p2 c)'
    t = shifted.reshape(B, C, h, p, w, p)
    t = jnp.transpose(t, (0, 2, 4, 3, 5, 1))      # b h w p1 p2 c
    tokens = t.reshape(B * h * w, p * p * C)

    out = ln_linear(tokens, gamma, beta, w_lin, b_lin)
    return out.reshape(B, h * w, -1)


def shifted_patch_tokenization(x, gamma, beta, w_lin, b_lin, patch_size):
    B, C, H, W = x.shape
    h, w = H // patch_size, W // patch_size
    out = _spt_forward(x, gamma, beta, w_lin, b_lin, patch_size)
    return out, (h, w)


if __name__ == "__main__":
    # Small shapes consistent with the module.
    B, C, Himg, Wimg = 2, 4, 16, 16
    patch_size = 4
    dim = 32
    patch_dim = C * patch_size * patch_size                 # 64

    key = jax.random.PRNGKey(0)
    k1, k2, k3 = jax.random.split(key, 3)
    x = jax.random.normal(k1, (B, C, Himg, Wimg), jnp.float32)
    # nn.Linear(patch_dim, dim): weight stored pre-transposed as (patch_dim, dim).
    w_lin = jax.random.normal(k2, (patch_dim, dim), jnp.float32) * 0.02
    b_lin = jax.random.normal(k3, (dim,), jnp.float32) * 0.02
    gamma = jnp.ones((patch_dim,), jnp.float32)              # LayerNorm defaults
    beta = jnp.zeros((patch_dim,), jnp.float32)

    out, (h, w) = shifted_patch_tokenization(x, gamma, beta, w_lin, b_lin,
                                             patch_size)
    out = jax.block_until_ready(out)

    # Pure-JAX f32 reference for verification.
    s = patch_size // 2
    xpad = jnp.pad(x, ((0, 0), (0, 0), (s, s), (s, s)))
    xc = (x
          + xpad[:, :, :-2 * s, :-2 * s]
          + xpad[:, :, :-2 * s, 2 * s:]
          + xpad[:, :, 2 * s:, :-2 * s]
          + xpad[:, :, 2 * s:, 2 * s:])
    t = xc.reshape(B, C, h, patch_size, w, patch_size)
    t = jnp.transpose(t, (0, 2, 4, 3, 5, 1)).reshape(B, h * w, patch_dim)
    mean = t.mean(-1, keepdims=True)
    var = ((t - mean) ** 2).mean(-1, keepdims=True)
    tn = (t - mean) / jnp.sqrt(var + 1e-5) * gamma + beta
    ref = tn @ w_lin + b_lin

    assert out.shape == (B, h * w, dim), out.shape
    assert (h, w) == (Himg // patch_size, Wimg // patch_size)
    # bf16 token / weight / output path -> bf16-level tolerance.
    err = float(jnp.max(jnp.abs(out.astype(jnp.float32) - ref)))
    assert err < 3e-2, err

    print("KERNEL_OK")
</pallas_src>

<mosaic_0001>
module attributes {stable_mosaic.version = 11 : i64} {
  func.func @_ln_linear_kernel(%arg0: i32, %arg1: memref<32x64xbf16, #tpu.memory_space<vmem>>, %arg2: memref<64x32xbf16, #tpu.memory_space<vmem>>, %arg3: memref<1x32xf32, #tpu.memory_space<vmem>>, %arg4: memref<32x32xbf16, #tpu.memory_space<vmem>>) attributes {dimension_semantics = [#tpu.dimension_semantics<parallel>], iteration_bounds = array<i64: 1>, scalar_prefetch = 0 : i64, scratch_operands = 0 : i64, tpu.core_type = #tpu.core_type<tc>, window_params = [{transform_indices = @transform_0, window_bounds = array<i64: 32, 64>}, {pipeline_mode = #tpu.pipeline_mode<synchronous>, transform_indices = @transform_1, window_bounds = array<i64: 64, 32>}, {pipeline_mode = #tpu.pipeline_mode<synchronous>, transform_indices = @transform_2, window_bounds = array<i64: 1, 32>}, {transform_indices = @transform_3, window_bounds = array<i64: 32, 32>}]} {
    %c0 = arith.constant 0 : index
    %c0_0 = arith.constant 0 : index
    %0 = vector.load %arg1[%c0, %c0_0] : memref<32x64xbf16, #tpu.memory_space<vmem>>, vector<32x64xbf16>
    %1 = arith.extf %0 : vector<32x64xbf16> to vector<32x64xf32>
    %cst = arith.constant dense<0.000000e+00> : vector<32xf32>
    %2 = vector.multi_reduction <add>, %1, %cst [1] : vector<32x64xf32> to vector<32xf32>
    %3 = vector.shape_cast %2 : vector<32xf32> to vector<32x1xf32>
    %4 = arith.mulf %1, %1 : vector<32x64xf32>
    %cst_1 = arith.constant dense<0.000000e+00> : vector<32xf32>
    %5 = vector.multi_reduction <add>, %4, %cst_1 [1] : vector<32x64xf32> to vector<32xf32>
    %6 = vector.shape_cast %5 : vector<32xf32> to vector<32x1xf32>
    %cst_2 = arith.constant 1.562500e-02 : f32
    %7 = vector.broadcast %cst_2 : f32 to vector<32x1xf32>
    %8 = arith.mulf %3, %7 : vector<32x1xf32>
    %cst_3 = arith.constant 1.562500e-02 : f32
    %9 = vector.broadcast %cst_3 : f32 to vector<32x1xf32>
    %10 = arith.mulf %6, %9 : vector<32x1xf32>
    %11 = arith.mulf %8, %8 : vector<32x1xf32>
    %12 = arith.subf %10, %11 : vector<32x1xf32>
    %cst_4 = arith.constant 0.000000e+00 : f32
    %13 = vector.broadcast %cst_4 : f32 to vector<32x1xf32>
    %14 = arith.maximumf %12, %13 : vector<32x1xf32>
    %15 = vector.broadcast %8 : vector<32x1xf32> to vector<32x64xf32>
    %16 = arith.subf %1, %15 : vector<32x64xf32>
    %cst_5 = arith.constant 9.99999974E-6 : f32
    %17 = vector.broadcast %cst_5 : f32 to vector<32x1xf32>
    %18 = arith.addf %14, %17 : vector<32x1xf32>
    %19 = math.rsqrt %18 : vector<32x1xf32>
    %20 = vector.broadcast %19 : vector<32x1xf32> to vector<32x64xf32>
    %21 = arith.mulf %16, %20 : vector<32x64xf32>
    %22 = arith.truncf %21 : vector<32x64xf32> to vector<32x64xbf16>
    %c0_6 = arith.constant 0 : index
    %c0_7 = arith.constant 0 : index
    %23 = vector.load %arg2[%c0_6, %c0_7] : memref<64x32xbf16, #tpu.memory_space<vmem>>, vector<64x32xbf16>
    %cst_8 = arith.constant dense<0.000000e+00> : vector<32x32xf32>
    %24 = tpu.matmul %22, %23, %cst_8 {dimension_numbers = #tpu.dot_dimension_numbers<[1], [0], [0], [1], [0, 0, 1, 1], [], []>} : vector<32x64xbf16>, vector<64x32xbf16>, vector<32x32xf32> -> vector<32x32xf32>
    %c0_9 = arith.constant 0 : index
    %c0_10 = arith.constant 0 : index
    %25 = vector.load %arg3[%c0_9, %c0_10] : memref<1x32xf32, #tpu.memory_space<vmem>>, vector<1x32xf32>
    %26 = vector.broadcast %25 : vector<1x32xf32> to vector<32x32xf32>
    %27 = arith.addf %24, %26 : vector<32x32xf32>
    %28 = arith.truncf %27 : vector<32x32xf32> to vector<32x32xbf16>
    %c0_11 = arith.constant 0 : index
    %c0_12 = arith.constant 0 : index
    %29 = vector.load %arg4[%c0_11, %c0_12] : memref<32x32xbf16, #tpu.memory_space<vmem>>, vector<32x32xbf16>
    tpu.vector_store %arg4[%c0_11, %c0_12], %28 {strides = array<i32>} : memref<32x32xbf16, #tpu.memory_space<vmem>>, vector<32x32xbf16>,
    return
  }
  func.func @transform_0(%arg0: i32) -> (i32, i32) {
    %c0_i32 = arith.constant 0 : i32
    %c0_i32_0 = arith.constant 0 : i32
    return %arg0, %c0_i32 : i32, i32
  }
  func.func @transform_1(%arg0: i32) -> (i32, i32) {
    %c0_i32 = arith.constant 0 : i32
    %c0_i32_0 = arith.constant 0 : i32
    %c0_i32_1 = arith.constant 0 : i32
    return %c0_i32, %c0_i32_0 : i32, i32
  }
  func.func @transform_2(%arg0: i32) -> (i32, i32) {
    %c0_i32 = arith.constant 0 : i32
    %c0_i32_0 = arith.constant 0 : i32
    %c0_i32_1 = arith.constant 0 : i32
    return %c0_i32, %c0_i32_0 : i32, i32
  }
  func.func @transform_3(%arg0: i32) -> (i32, i32) {
    %c0_i32 = arith.constant 0 : i32
    %c0_i32_0 = arith.constant 0 : i32
    return %arg0, %c0_i32 : i32, i32
  }
}

</mosaic_0001>

<llo_original>
// kernel: _spt_forward.1
$region0: #{_spt_forward.1}
  #allocation0 [shape = 'u32[]', space=smem, size = 0x4, offset = 0x4, fixed_abs, tag = 'smem constant byte address 0x4 - core index']
  #allocation1 [shape = 'u32[144,128]{1,0:T(1,128)}', space=vmem, size = 0x12000, scoped, tag = 'internal scratch']
  %s0 = inlined_call_operand.vmem [shape: bf16[32,64], index: 0, kind: input, shape index: {}]
  %s1 = inlined_call_operand.vmem [shape: bf16[64,32], index: 1, kind: input, shape index: {}]
  %s2 = inlined_call_operand.vmem [shape: f32[1,32], index: 2, kind: input, shape index: {}]
  %s3 = inlined_call_operand.hbm [shape: bf16[32,32], index: 3, kind: output, shape index: {}]
  %s4 = sld [smem:[#allocation0]]
  $region22: #{_spt_forward.1} parent=0
    _
  %s6 = ssub.s32 1, %s4
  %s7 = scalar_select 0, %s6, %s4
  $region1: #{_spt_forward.1} parent=0
    #allocation2 [shape = 'u8[8192]{0}', space=vmem, size = 0x2000, scoped, tag = 'output window, operand 0, single buffered']
    #allocation3 [shape = 's32[1]{0}', space=sflag, size = 0x4, scoped, tag = 'scoped memory for _spt_forward.1']
    %8 = vsyncpa [#allocation3], 0
    // Predicated region
    $region2: #{_spt_forward.1} parent=1 // pred_check
      _
    $region3: #{_spt_forward.1} parent=1 // pred_check_branch
      %10 = sbr.rel (0) target = $region5
    $region4: #{_spt_forward.1} parent=1 // pred_region
      _
    $region5: #{_spt_forward.1} parent=1 // pred_fallthru
      _
    // Predicated region
    $region6: #{_spt_forward.1} parent=1 // pred_check
      _
    $region7: #{_spt_forward.1} parent=1 // pred_check_branch
      %12 = sbr.rel (0) target = $region9
    $region8: #{_spt_forward.1} parent=1 // pred_region
      _
    $region9: #{_spt_forward.1} parent=1 // pred_fallthru
      _
    // Predicated region
    $region10: #{_spt_forward.1} parent=1 // pred_check
      _
    $region11: #{_spt_forward.1} parent=1 // pred_check_branch
      %14 = sbr.rel (0) target = $region13
    $region12: #{_spt_forward.1} parent=1 // pred_region
      _
    $region13: #{_spt_forward.1} parent=1 // pred_fallthru
      _
    %v16 = vld [vmem:[%s0] sm:$0xf]
    %v17 = vld [vmem:[%s0 + $0x4] sm:$0xf]
    %v18 = vld [vmem:[%s0 + $0x8] sm:$0xf]
    %v19 = vld [vmem:[%s0 + $0xc] sm:$0xf]
    %v20 = vunpack.c.l.bf16 %v16
    %v21 = vunpack.c.l.bf16 %v17
    %v22 = vunpack.c.l.bf16 %v18
    %v23 = vunpack.c.l.bf16 %v19
    %vm24 = vcmask 523264
    %v25 = vsel %vm24, %v20, 0.0
    %26 = vadd.xlane.f32.xlu0 %v25
    %v27 = vpop.xlane.xlu0 %26
    %v28 = vsel %vm24, %v21, 0.0
    %29 = vadd.xlane.f32.xlu0 %v28
    %v30 = vpop.xlane.xlu0 %29
    %v31 = vsel %vm24, %v22, 0.0
    %32 = vadd.xlane.f32.xlu0 %v31
    %v33 = vpop.xlane.xlu0 %32
    %v34 = vsel %vm24, %v23, 0.0
    %35 = vadd.xlane.f32.xlu0 %v34
    %v36 = vpop.xlane.xlu0 %35
    %v37 = vmul.f32 %v20, %v20
    %v38 = vmul.f32 %v21, %v21
    %v39 = vmul.f32 %v22, %v22
    %v40 = vmul.f32 %v23, %v23
    %v41 = vsel %vm24, %v37, 0.0
    %42 = vadd.xlane.f32.xlu0 %v41
    %v43 = vpop.xlane.xlu0 %42
    %v44 = vsel %vm24, %v38, 0.0
    %45 = vadd.xlane.f32.xlu0 %v44
    %v46 = vpop.xlane.xlu0 %45
    %v47 = vsel %vm24, %v39, 0.0
    %48 = vadd.xlane.f32.xlu0 %v47
    %v49 = vpop.xlane.xlu0 %48
    %v50 = vsel %vm24, %v40, 0.0
    %51 = vadd.xlane.f32.xlu0 %v50
    %v52 = vpop.xlane.xlu0 %51
    %v53 = vmul.f32 %v27, 0.015625
    %v54 = vmul.f32 %v30, 0.015625
    %v55 = vmul.f32 %v33, 0.015625
    %v56 = vmul.f32 %v36, 0.015625
    %v57 = vmul.f32 %v43, 0.015625
    %v58 = vmul.f32 %v46, 0.015625
    %v59 = vmul.f32 %v49, 0.015625
    %v60 = vmul.f32 %v52, 0.015625
    %v61 = vmul.f32 %v53, %v53
    %v62 = vmul.f32 %v54, %v54
    %v63 = vmul.f32 %v55, %v55
    %v64 = vmul.f32 %v56, %v56
    %v65 = vsub.f32 %v57, %v61
    %v66 = vsub.f32 %v58, %v62
    %v67 = vsub.f32 %v59, %v63
    %v68 = vsub.f32 %v60, %v64
    %v69 = vmax.f32 %v65, 0.0
    %v70 = vmax.f32 %v66, 0.0
    %v71 = vmax.f32 %v67, 0.0
    %v72 = vmax.f32 %v68, 0.0
    %v73 = vsub.f32 %v20, %v53
    %v74 = vsub.f32 %v21, %v54
    %v75 = vsub.f32 %v22, %v55
    %v76 = vsub.f32 %v23, %v56
    %v77 = vadd.f32 %v69, 1e-05
    %v78 = vadd.f32 %v70, 1e-05
    %v79 = vadd.f32 %v71, 1e-05
    %v80 = vadd.f32 %v72, 1e-05
    %v81 = vrsqrt.pop %v77
    %v82 = vrsqrt.pop %v78
    %v83 = vrsqrt.pop %v79
    %v84 = vrsqrt.pop %v80
    %v85 = vmul.f32 %v73, %v81
    %v86 = vmul.f32 %v74, %v82
    %v87 = vmul.f32 %v75, %v83
    %v88 = vmul.f32 %v76, %v84
    %v89 = vpack.c.bf16 %v86, %v85
    %v90 = vpack.c.bf16 %v88, %v87
    %v91 = vld [vmem:[%s1] sm:$0xf]
    %v92 = vld [vmem:[%s1 + $0x4] sm:$0xf]
    %v93 = vld [vmem:[%s1 + $0x8] sm:$0xf]
    %v94 = vld [vmem:[%s1 + $0xc] sm:$0xf]
    %v95 = vld [vmem:[%s1 + $0x10] sm:$0xf]
    %v96 = vld [vmem:[%s1 + $0x14] sm:$0xf]
    %v97 = vld [vmem:[%s1 + $0x18] sm:$0xf]
    %v98 = vld [vmem:[%s1 + $0x1c] sm:$0xf]
    %v99 = vld [vmem:[%s2] sm:$0x1]
    %v101 = vlaneseq
    %v102 = vshrl.u32 %v101, 7
    %v103 = vsub.s32 0, %v102
    %v104 = vrot.slane %v99, %v103
    %v114 = vunpack.c.l.b16 %v91
    %v115 = vunpack.c.l.b16 %v92
    %v116 = vunpack.c.l.b16 %v93
    %v117 = vunpack.c.l.b16 %v94
    %v118 = vunpack.c.l.b16 %v95
    %v119 = vunpack.c.l.b16 %v96
    %v120 = vunpack.c.l.b16 %v97
    %v121 = vunpack.c.l.b16 %v98
    %v122 = vpack.c.b16 %v115, %v114
    %v123 = vpack.c.b16 %v117, %v116
    %v124 = vpack.c.b16 %v119, %v118
    %v125 = vpack.c.b16 %v121, %v120
    %v131 = vsel %vm24, %v89, 0
    %v134 = vsel %vm24, %v90, 0
    %136 = vmatprep.subr.bf16.mxu0 0
    %137 = vmatpush1.bf16.msra.mxu0 %v122
    %138 = vmatprep.subr.bf16.mxu0 0
    %139 = vmatpush1.bf16.msra.mxu0 %v123
    %140 = vmatprep.subr.bf16.mxu0 0
    %141 = vmatpush1.bf16.msra.mxu0 %v124
    %142 = vmatprep.subr.bf16.mxu0 0
    %143 = vmatpush1.bf16.msra.mxu0 %v125
    %144 = vmatprep.subr.bf16.mxu0 0
    %145 = vmatpush1.bf16.msra.mxu0 0
    %146 = vmatprep.subr.bf16.mxu0 0
    %147 = vmatpush1.bf16.msra.mxu0 0
    %148 = vmatprep.subr.bf16.mxu0 0
    %149 = vmatpush1.bf16.msra.mxu0 0
    %150 = vmatprep.subr.bf16.mxu0 0
    %151 = vmatpush1.bf16.msra.mxu0 0
    %152 = vmatprep.subr.bf16.mxu0 0
    %153 = vmatpush1.bf16.msra.mxu0 0
    %154 = vmatprep.subr.bf16.mxu0 0
    %155 = vmatpush1.bf16.msra.mxu0 0
    %156 = vmatprep.subr.bf16.mxu0 0
    %157 = vmatpush1.bf16.msra.mxu0 0
    %158 = vmatprep.subr.bf16.mxu0 0
    %159 = vmatpush1.bf16.msra.mxu0 0
    %160 = vmatprep.subr.bf16.mxu0 0
    %161 = vmatpush1.bf16.msra.mxu0 0
    %162 = vmatprep.subr.bf16.mxu0 0
    %163 = vmatpush1.bf16.msra.mxu0 0
    %164 = vmatprep.subr.bf16.mxu0 0
    %165 = vmatpush1.bf16.msra.mxu0 0
    %166 = vmatprep.subr.bf16.mxu0 0
    %167 = vmatpush1.bf16.msra.mxu0 0
    %168 = vmatprep.mubr.bf16.mxu0 0
    %169 = vmatmul.mubr.bf16.gmra.mrb[0].mxu0 %v131
    %v170 = vpop.f32.mrb[0].mxu0
    %v171 = vadd.f32 %v104, %v170
    %v172 = vpop.f32.mrb[0].mxu0
    %v173 = vpop.f32.mrb[0].mxu0
    %v174 = vadd.f32 %v104, %v173
    %v175 = vpop.f32.mrb[0].mxu0
    %176 = vmatprep.mubr.bf16.mxu0 0
    %177 = vmatmul.mubr.bf16.gmra.mrb[0].mxu0 %v134
    %v178 = vpop.f32.mrb[0].mxu0
    %v179 = vadd.f32 %v104, %v178
    %v180 = vpop.f32.mrb[0].mxu0
    %v181 = vpop.f32.mrb[0].mxu0
    %v182 = vadd.f32 %v104, %v181
    %v183 = vpop.f32.mrb[0].mxu0
    %184 = vdwg.mxu0
    %v185 = vpack.c.bf16 %v174, %v171
    %v186 = vpack.c.bf16 %v182, %v179
    %v189 = vunpack.c.l.b16 %v185
    %v190 = vunpack.c.h.b16 %v185
    %v191 = vunpack.c.l.b16 %v186
    %v192 = vunpack.c.h.b16 %v186
    %v193 = vpack.c.b16 %v189, %v189
    %v194 = vpack.c.b16 %v190, %v190
    %v195 = vpack.c.b16 %v191, %v191
    %v196 = vpack.c.b16 %v192, %v192
    %vm201 = vcmask 257024
    %202 = vst.msk [vmem:[#allocation2] sm:$0xf] %vm201, %v193
    %203 = vst.msk [vmem:[#allocation2 + $0x4] sm:$0xf] %vm201, %v194
    %204 = vst.msk [vmem:[#allocation2 + $0x8] sm:$0xf] %vm201, %v195
    %205 = vst.msk [vmem:[#allocation2 + $0xc] sm:$0xf] %vm201, %v196
    // Predicated region
    $region14: #{_spt_forward.1} parent=1 // pred_check
      _
    $region15: #{_spt_forward.1} parent=1 // pred_check_branch
      %207 = sbr.rel (0) target = $region17
    $region16: #{_spt_forward.1} parent=1 // pred_region
      %s209 = ssub.s32 256, 256
      %210 = vsyncadd [#allocation3], %s209
      %s211 = sshll.u32 [#allocation2], 4
      %s212 = int_to_ptr.vmem [resolvable:$true] %s211
      %217 = dma.vmem_to_hbm [thread:$0]  %s212, 256, %s3, [#allocation3], 64, 64, 4
    $region17: #{_spt_forward.1} parent=1 // pred_fallthru
      _
    // Predicated region
    $region18: #{_spt_forward.1} parent=1 // pred_check
      _
    $region19: #{_spt_forward.1} parent=1 // pred_check_branch
      %219 = sbr.rel (0) target = $region21
    $region20: #{_spt_forward.1} parent=1 // pred_region
      %220 = dma.done [#allocation3], 256
    $region21: #{_spt_forward.1} parent=1 // pred_fallthru
      _
    %221 = vsyncpa [#allocation3], 1

</llo_original>
